<compile_context>
chip_gen: v7x
topology: tpu7x:2x2x1
jax: 0.10.0
libtpu: 0.0.40
codegen_flags: <defaults>
</compile_context>

<pallas_src>
import math

import jax
import jax.numpy as jnp
from jax.experimental import pallas as pl
from jax.experimental.pallas import tpu as pltpu

EPS = 1e-10            # ChannelScorer clamp epsilon
GUMBEL_EPS = 1e-8      # GumbelSoftMax eps
INV_HARD_TEMP = 10.0   # 1 / gumbel_hard_temp (0.1)

# module hyper-parameters (ChannelScorer_Policy.__init__)
FT = 10                # conv1 out channels
FS = 10                # conv2 out channels
KW = 17                # conv1 kernel width (time)
PAD = 8                # conv1 'same' padding (time)
POOL = 75              # AvgPool2d kernel (time)
STRIDE = 15            # AvgPool2d stride (time)


def _pool_len(T):
    return (T - POOL) // STRIDE + 1


def make_kernel(B, M, T):
    assert (T - POOL) % STRIDE == 0, "T must satisfy (T - 75) % 15 == 0"
    P = _pool_len(T)
    BM = B * M
    BFS = B * FS
    Tpad = T + 2 * PAD

    def kernel(itemp_ref,              # SMEM (1,)   : 1 / gumbel_temp
               x_ref,                  # VMEM (BM,T) : x packed, rows b*M+m
               maskc_ref,              # VMEM (BM,1) : mask packed as a column
               maskbm_ref,             # VMEM (B,M)  : mask
               u_ref,                  # VMEM (B,M)  : uniform Gumbel noise
               wmat_ref,               # VMEM (BFS, KW*BM) fused conv1∘conv2
               beff_ref,               # VMEM (BFS,1) fused conv bias
               pmat_ref,               # VMEM (T,P)  avg-pool matrix (1/75)
               w1f_ref,                # VMEM (P,BFS,M) fc1 feature weights
               amat_ref,               # VMEM (B,BFS) fs-group-sum matrix
               w1m_ref,                # VMEM (M,M)  fc1 mask columns
               zs_ref,                 # VMEM (1,M)  zerostart
               sel_ref, rate_ref,      # VMEM (B,M)  outputs
               xpad_ref):              # VMEM scratch (BM, Tpad)
        # ---- PolicySelector: x_current = mask * x (packed B*M sublanes) -----
        x_cur = x_ref[...] * maskc_ref[...]                       # (BM, T)

        # whole-tensor zero-input flag (drives zerostart branch + rate head)
        zflag = (jnp.sum(jnp.abs(x_cur)) < 1e-16).astype(jnp.float32)

        # ---- conv 'same' padding: one-vreg VMEM scratch ----------------------
        xpad_ref[...] = jnp.zeros((BM, Tpad), jnp.float32)
        xpad_ref[:, pl.ds(PAD, T)] = x_cur
        xp = xpad_ref[...]                                        # (BM, Tpad)

        # im2col: 17 lane-shifted windows, stacked along sublanes.  Each piece
        # is a full 8-sublane tile so the concat is tile-aligned (near-free).
        x3 = jnp.concatenate([xp[:, k:k + T] for k in range(KW)], axis=0)
        # x3: (KW*BM, T), row index k*BM + b*M + m

        # ---- fused conv1 ∘ conv2 (incl. the M-collapse) as ONE MXU matmul ----
        # wmat[b*FS+fs, k*BM + b'*M + m] = (b==b') * sum_ft cw2[fs,ft,m]*cw1[ft,k]
        z = jnp.dot(wmat_ref[...], x3,
                    preferred_element_type=jnp.float32)           # (BFS, T)
        z = z + beff_ref[...]                                     # bias, lane-bcast

        # ---- square -> AvgPool (ONE matmul) -> log(clamp) --------------------
        pooled = jnp.dot(z * z, pmat_ref[...],
                         preferred_element_type=jnp.float32)      # (BFS, P)
        ql = jnp.log(jnp.maximum(pooled, EPS))                    # (BFS, P)

        # ---- fc1 --------------------------------------------------------------
        # h[b*FS+fs, m] = sum_p ql[b*FS+fs, p] * fc1_w[m, fs*P + p]
        h = ql[:, 0:1] * w1f_ref[0]
        for p in range(1, P):
            h = h + ql[:, p:p + 1] * w1f_ref[p]                   # (BFS, M)
        # sum the fs groups down to batch rows with one tiny matmul (MXU idle)
        feat = jnp.dot(amat_ref[...], h,
                       preferred_element_type=jnp.float32)        # (B, M)
        mask_bm = maskbm_ref[...]
        scores_conv = feat + jnp.dot(mask_bm, w1m_ref[...],
                                     preferred_element_type=jnp.float32)

        # ChannelScorer zero-input branch (branchless blend; both paths finite)
        scores = zflag * zs_ref[...] + (1.0 - zflag) * scores_conv
        # PolicySelector: suppress already-selected channels
        scores = scores - 1.0e6 * mask_bm

        # ---- Gumbel heads (training mode, freeze=False) ----------------------
        # TODO(synk): eval-mode / freeze=True hard one-hot (make_onehot) paths
        #             are not implemented; this covers the default training fwd.
        g = -jnp.log(-jnp.log(u_ref[...] + GUMBEL_EPS) + GUMBEL_EPS)
        noisy = scores + g

        def softmax_m(v):                                         # softmax over M
            mx = jnp.max(v, axis=1, keepdims=True)
            e = jnp.exp(v - mx)
            # exact divide kept for interpret-mode portability; on TPU this can
            # be pl.reciprocal(sum, approx=True) to use the idle EUP slot.
            return e / jnp.sum(e, axis=1, keepdims=True)

        selection = softmax_m(noisy * itemp_ref[0])               # both branches
        rate_g = softmax_m(scores * INV_HARD_TEMP)                # GumbelSoftMax.rate
        rate_s = softmax_m(noisy * INV_HARD_TEMP)                 # StochasticGumbel rate
        rate = zflag * rate_s + (1.0 - zflag) * rate_g

        sel_ref[...] = selection
        rate_ref[...] = rate

    return kernel, P, Tpad


def policy_selector_forward(x, mask, params, noise_key, temperature=1.0):
    """PolicySelector.forward, training mode, freeze=False.

    x: (B, 1, M, T) f32 (NCHW, like the PyTorch module); mask: (B, M) f32 (0/1);
    params: raw module parameters (see init_params); noise_key: PRNG key for the
    Gumbel noise (the torch.rand_like equivalent, drawn wrapper-side).
    """
    B, _, M, T = x.shape
    assert (T - POOL) % STRIDE == 0, "T must satisfy (T - 75) % 15 == 0"
    P = _pool_len(T)
    BM, BFS = B * M, B * FS
    cw1, cb1, cw2, cb2, fc1_w, zstart = params

    kernel, _, Tpad = make_kernel(B, M, T)

    # ---- parameter folding (tiny einsums; parameter-only transforms) --------
    mask = mask.astype(jnp.float32)
    weff = jnp.einsum('sfm,fk->smk', cw2, cw1)                    # (FS, M, KW)
    beff = cb2 + jnp.einsum('sfm,f->s', cw2, cb1)                 # (FS,)
    eye_b = jnp.eye(B, dtype=jnp.float32)
    # wmat[b*FS+fs, k*BM + b'*M + m] = (b==b') * weff[fs, m, k]
    wmat = jnp.einsum('bc,smk->bskcm', eye_b, weff).reshape(BFS, KW * BM)
    beff_rows = jnp.tile(beff, B)[:, None]                        # (BFS, 1)
    # average-pool as a (T, P) matrix (MXU does the time reduction)
    t_idx = jnp.arange(T)[:, None]
    p_idx = jnp.arange(P)[None, :]
    pmat = (((t_idx >= p_idx * STRIDE) & (t_idx < p_idx * STRIDE + POOL))
            .astype(jnp.float32) / POOL)                          # (T, P)
    # fc1 split: feature columns (torch flatten is fs-major, p-minor) + mask cols
    w1f = fc1_w[:, :FS * P].T.reshape(FS, P, M)                   # [fs, p, m]
    w1f_rows = jnp.tile(jnp.transpose(w1f, (1, 0, 2)), (1, B, 1)) # (P, BFS, M)
    w1m = fc1_w[:, FS * P:].T                                     # (M, M)
    amat = jnp.repeat(eye_b, FS, axis=1)                          # (B, BFS)
    zs = zstart.reshape(1, M)

    # Gumbel uniform noise (torch.rand_like over the scores), drawn here so the
    # kernel has no TPU-only PRNG primitive and the caller controls freshness.
    u = jax.random.uniform(noise_key, (B, M), jnp.float32)

    inv_temp = (1.0 / jnp.asarray(temperature, jnp.float32)).reshape(1)

    smem = pl.BlockSpec(memory_space=pltpu.MemorySpace.SMEM)
    vmem = pl.BlockSpec(memory_space=pltpu.MemorySpace.VMEM)

    flops = (2 * BFS * (KW * BM) * T        # fused conv matmul
             + BFS * T                      # square
             + 2 * BFS * T * P              # avg-pool matmul
             + 3 * BFS * P * M              # fc1 per-row products
             + 2 * B * BFS * M              # fs-group-sum matmul
             + 2 * B * M * M                # mask columns
             + 40 * B * M)                  # gumbel / softmax arithmetic
    transcendentals = BFS * P + 8 * B * M
    bytes_accessed = 4 * (BM * T + BM + 3 * B * M + BFS * KW * BM + BFS
                          + T * P + P * BFS * M + B * BFS + M * M + M
                          + 2 * B * M + 1)

    sel, rate = pl.pallas_call(
        kernel,
        out_shape=(jax.ShapeDtypeStruct((B, M), jnp.float32),
                   jax.ShapeDtypeStruct((B, M), jnp.float32)),
        in_specs=[smem] + [vmem] * 11,
        out_specs=(vmem, vmem),
        scratch_shapes=[pltpu.VMEM((BM, Tpad), jnp.float32)],
        cost_estimate=pl.CostEstimate(flops=flops,
                                      transcendentals=transcendentals,
                                      bytes_accessed=bytes_accessed),
    )(inv_temp,
      x[:, 0].reshape(BM, T),               # packed (B*M, T), rows b*M+m
      mask.reshape(BM, 1),                  # packed mask column
      mask,
      u,
      wmat, beff_rows, pmat, w1f_rows, amat, w1m, zs)

    # match the module's (B, M, 1) selection / rate shapes
    return sel.reshape(B, M, 1), rate.reshape(B, M, 1)


def init_params(key, M, T):
    """PyTorch-default-style init (uniform +-1/sqrt(fan_in)); raw module params:
    conv1 (FT,KW)+(FT,), conv2 (FS,FT,M)+(FS,), fc1 weight (M, FS*P+M, no bias),
    zerostart (M,1).  The wrapper folds them into the kernel's matmul forms."""
    assert (T - POOL) % STRIDE == 0, "T must satisfy (T - 75) % 15 == 0"
    P = _pool_len(T)
    fc1_in = FS * P + M                     # == int(FS*(1+floor(T-75)/15)) + M
    ks = jax.random.split(key, 6)

    def u(k, shape, fan_in):
        b = 1.0 / math.sqrt(fan_in)
        return jax.random.uniform(k, shape, jnp.float32, -b, b)

    cw1 = u(ks[0], (FT, KW), 1 * 1 * KW)        # conv1.weight (FT,1,1,17) squeezed
    cb1 = u(ks[1], (FT,), 1 * 1 * KW)           # conv1.bias
    cw2 = u(ks[2], (FS, FT, M), FT * M * 1)     # conv2.weight (FS,FT,M,1) squeezed
    cb2 = u(ks[3], (FS,), FT * M * 1)           # conv2.bias
    fc1_w = u(ks[4], (M, fc1_in), fc1_in)       # fc1.weight (bias=False)
    zstart = 0.01 * jax.random.normal(ks[5], (M, 1), jnp.float32)   # zerostart
    return (cw1, cb1, cw2, cb2, fc1_w, zstart)


if __name__ == "__main__":
    B, M, T = 2, 4, 90                      # (T - 75) % 15 == 0 -> pool length P = 2
    key = jax.random.PRNGKey(0)
    kx, km, kp, kn = jax.random.split(key, 4)

    x = jax.random.normal(kx, (B, 1, M, T), jnp.float32)
    # binary mask of already-selected channels (0/1), as the module uses it
    mask = (jax.random.uniform(km, (B, M)) < 0.5).astype(jnp.float32)
    params = init_params(kp, M, T)

    fwd = jax.jit(policy_selector_forward)
    selection, rate = fwd(x, mask, params, kn, 1.0)
    selection, rate = jax.block_until_ready((selection, rate))

    assert selection.shape == (B, M, 1), selection.shape
    assert rate.shape == (B, M, 1), rate.shape
    assert bool(jnp.all(jnp.isfinite(selection)))
    assert bool(jnp.all(jnp.isfinite(rate)))
    # both heads are softmaxes over the M channels
    assert bool(jnp.allclose(jnp.sum(selection, axis=1), 1.0, atol=1e-5))
    assert bool(jnp.allclose(jnp.sum(rate, axis=1), 1.0, atol=1e-5))
    print("KERNEL_OK")
</pallas_src>

<mosaic_0001>
module attributes {stable_mosaic.version = 11 : i64} {
  func.func @kernel(%arg0: memref<1xf32, #tpu.memory_space<smem>>, %arg1: memref<8x90xf32, #tpu.memory_space<vmem>>, %arg2: memref<8x1xf32, #tpu.memory_space<vmem>>, %arg3: memref<2x4xf32, #tpu.memory_space<vmem>>, %arg4: memref<2x4xf32, #tpu.memory_space<vmem>>, %arg5: memref<20x136xf32, #tpu.memory_space<vmem>>, %arg6: memref<20x1xf32, #tpu.memory_space<vmem>>, %arg7: memref<90x2xf32, #tpu.memory_space<vmem>>, %arg8: memref<2x20x4xf32, #tpu.memory_space<vmem>>, %arg9: memref<2x20xf32, #tpu.memory_space<vmem>>, %arg10: memref<4x4xf32, #tpu.memory_space<vmem>>, %arg11: memref<1x4xf32, #tpu.memory_space<vmem>>, %arg12: memref<2x4xf32, #tpu.memory_space<vmem>>, %arg13: memref<2x4xf32, #tpu.memory_space<vmem>>, %arg14: memref<8x106xf32, #tpu.memory_space<vmem>>) attributes {dimension_semantics = [], scalar_prefetch = 0 : i64, scratch_operands = 1 : i64, tpu.core_type = #tpu.core_type<tc>} {
    %c0 = arith.constant 0 : index
    %c0_0 = arith.constant 0 : index
    %0 = vector.load %arg1[%c0, %c0_0] : memref<8x90xf32, #tpu.memory_space<vmem>>, vector<8x90xf32>
    %c0_1 = arith.constant 0 : index
    %c0_2 = arith.constant 0 : index
    %1 = vector.load %arg2[%c0_1, %c0_2] : memref<8x1xf32, #tpu.memory_space<vmem>>, vector<8x1xf32>
    %2 = vector.broadcast %1 : vector<8x1xf32> to vector<8x90xf32>
    %3 = arith.mulf %0, %2 : vector<8x90xf32>
    %4 = math.absf %3 : vector<8x90xf32>
    %5 = vector.shape_cast %4 : vector<8x90xf32> to vector<1x8x90xf32>
    %cst = arith.constant dense<0.000000e+00> : vector<1xf32>
    %6 = vector.multi_reduction <add>, %5, %cst [1, 2] : vector<1x8x90xf32> to vector<1xf32>
    %7 = vector.shape_cast %6 : vector<1xf32> to vector<1x1x1xf32>
    %8 = vector.extract %7[0, 0, 0] : f32 from vector<1x1x1xf32>
    %cst_3 = arith.constant 1.000000e-16 : f32
    %9 = arith.cmpf olt, %8, %cst_3 : f32
    %10 = arith.extui %9 : i1 to i32
    %11 = arith.sitofp %10 : i32 to f32
    %cst_4 = arith.constant 0.000000e+00 : f32
    %12 = vector.broadcast %cst_4 : f32 to vector<8x106xf32>
    %c0_5 = arith.constant 0 : index
    %c0_6 = arith.constant 0 : index
    %13 = vector.load %arg14[%c0_5, %c0_6] : memref<8x106xf32, #tpu.memory_space<vmem>>, vector<8x106xf32>
    tpu.vector_store %arg14[%c0_5, %c0_6], %12 {strides = array<i32>} : memref<8x106xf32, #tpu.memory_space<vmem>>, vector<8x106xf32>,
    %c0_7 = arith.constant 0 : index
    %c8 = arith.constant 8 : index
    %14 = vector.load %arg14[%c0_7, %c8] : memref<8x106xf32, #tpu.memory_space<vmem>>, vector<8x90xf32>
    tpu.vector_store %arg14[%c0_7, %c8], %3 {strides = array<i32>} : memref<8x106xf32, #tpu.memory_space<vmem>>, vector<8x90xf32>,
    %c0_8 = arith.constant 0 : index
    %c0_9 = arith.constant 0 : index
    %15 = vector.load %arg14[%c0_8, %c0_9] : memref<8x106xf32, #tpu.memory_space<vmem>>, vector<8x106xf32>
    %16 = vector.extract_strided_slice %15 {offsets = [0, 0], sizes = [8, 90], strides = [1, 1]} : vector<8x106xf32> to vector<8x90xf32>
    %17 = vector.extract_strided_slice %15 {offsets = [0, 1], sizes = [8, 90], strides = [1, 1]} : vector<8x106xf32> to vector<8x90xf32>
    %18 = vector.extract_strided_slice %15 {offsets = [0, 2], sizes = [8, 90], strides = [1, 1]} : vector<8x106xf32> to vector<8x90xf32>
    %19 = vector.extract_strided_slice %15 {offsets = [0, 3], sizes = [8, 90], strides = [1, 1]} : vector<8x106xf32> to vector<8x90xf32>
    %20 = vector.extract_strided_slice %15 {offsets = [0, 4], sizes = [8, 90], strides = [1, 1]} : vector<8x106xf32> to vector<8x90xf32>
    %21 = vector.extract_strided_slice %15 {offsets = [0, 5], sizes = [8, 90], strides = [1, 1]} : vector<8x106xf32> to vector<8x90xf32>
    %22 = vector.extract_strided_slice %15 {offsets = [0, 6], sizes = [8, 90], strides = [1, 1]} : vector<8x106xf32> to vector<8x90xf32>
    %23 = vector.extract_strided_slice %15 {offsets = [0, 7], sizes = [8, 90], strides = [1, 1]} : vector<8x106xf32> to vector<8x90xf32>
    %24 = vector.extract_strided_slice %15 {offsets = [0, 8], sizes = [8, 90], strides = [1, 1]} : vector<8x106xf32> to vector<8x90xf32>
    %25 = vector.extract_strided_slice %15 {offsets = [0, 9], sizes = [8, 90], strides = [1, 1]} : vector<8x106xf32> to vector<8x90xf32>
    %26 = vector.extract_strided_slice %15 {offsets = [0, 10], sizes = [8, 90], strides = [1, 1]} : vector<8x106xf32> to vector<8x90xf32>
    %27 = vector.extract_strided_slice %15 {offsets = [0, 11], sizes = [8, 90], strides = [1, 1]} : vector<8x106xf32> to vector<8x90xf32>
    %28 = vector.extract_strided_slice %15 {offsets = [0, 12], sizes = [8, 90], strides = [1, 1]} : vector<8x106xf32> to vector<8x90xf32>
    %29 = vector.extract_strided_slice %15 {offsets = [0, 13], sizes = [8, 90], strides = [1, 1]} : vector<8x106xf32> to vector<8x90xf32>
    %30 = vector.extract_strided_slice %15 {offsets = [0, 14], sizes = [8, 90], strides = [1, 1]} : vector<8x106xf32> to vector<8x90xf32>
    %31 = vector.extract_strided_slice %15 {offsets = [0, 15], sizes = [8, 90], strides = [1, 1]} : vector<8x106xf32> to vector<8x90xf32>
    %32 = vector.extract_strided_slice %15 {offsets = [0, 16], sizes = [8, 90], strides = [1, 1]} : vector<8x106xf32> to vector<8x90xf32>
    %33 = tpu.concatenate %16, %17, %18, %19, %20, %21, %22, %23, %24, %25, %26, %27, %28, %29, %30, %31 in 0 : vector<8x90xf32>, vector<8x90xf32>, vector<8x90xf32>, vector<8x90xf32>, vector<8x90xf32>, vector<8x90xf32>, vector<8x90xf32>, vector<8x90xf32>, vector<8x90xf32>, vector<8x90xf32>, vector<8x90xf32>, vector<8x90xf32>, vector<8x90xf32>, vector<8x90xf32>, vector<8x90xf32>, vector<8x90xf32> -> vector<128x90xf32>
    %34 = tpu.concatenate %33, %32 in 0 : vector<128x90xf32>, vector<8x90xf32> -> vector<136x90xf32>
    %c0_10 = arith.constant 0 : index
    %c0_11 = arith.constant 0 : index
    %35 = vector.load %arg5[%c0_10, %c0_11] : memref<20x136xf32, #tpu.memory_space<vmem>>, vector<20x136xf32>
    %cst_12 = arith.constant dense<0.000000e+00> : vector<20x90xf32>
    %36 = tpu.matmul %35, %34, %cst_12 {dimension_numbers = #tpu.dot_dimension_numbers<[1], [0], [0], [1], [0, 0, 1, 1], [], []>} : vector<20x136xf32>, vector<136x90xf32>, vector<20x90xf32> -> vector<20x90xf32>
    %c0_13 = arith.constant 0 : index
    %c0_14 = arith.constant 0 : index
    %37 = vector.load %arg6[%c0_13, %c0_14] : memref<20x1xf32, #tpu.memory_space<vmem>>, vector<20x1xf32>
    %38 = vector.broadcast %37 : vector<20x1xf32> to vector<20x90xf32>
    %39 = arith.addf %36, %38 : vector<20x90xf32>
    %40 = arith.mulf %39, %39 : vector<20x90xf32>
    %c0_15 = arith.constant 0 : index
    %c0_16 = arith.constant 0 : index
    %41 = vector.load %arg7[%c0_15, %c0_16] : memref<90x2xf32, #tpu.memory_space<vmem>>, vector<90x2xf32>
    %cst_17 = arith.constant dense<0.000000e+00> : vector<20x2xf32>
    %42 = tpu.matmul %40, %41, %cst_17 {dimension_numbers = #tpu.dot_dimension_numbers<[1], [0], [0], [1], [0, 0, 1, 1], [], []>} : vector<20x90xf32>, vector<90x2xf32>, vector<20x2xf32> -> vector<20x2xf32>
    %cst_18 = arith.constant 1.000000e-10 : f32
    %43 = vector.broadcast %cst_18 : f32 to vector<20x2xf32>
    %44 = arith.maximumf %42, %43 : vector<20x2xf32>
    %45 = math.log %44 : vector<20x2xf32>
    %46 = vector.extract_strided_slice %45 {offsets = [0, 0], sizes = [20, 1], strides = [1, 1]} : vector<20x2xf32> to vector<20x1xf32>
    %c0_19 = arith.constant 0 : index
    %c0_20 = arith.constant 0 : index
    %c0_21 = arith.constant 0 : index
    %47 = vector.load %arg8[%c0_19, %c0_20, %c0_21] : memref<2x20x4xf32, #tpu.memory_space<vmem>>, vector<1x20x4xf32>
    %48 = vector.shape_cast %47 : vector<1x20x4xf32> to vector<20x4xf32>
    %49 = vector.broadcast %46 : vector<20x1xf32> to vector<20x4xf32>
    %50 = arith.mulf %49, %48 : vector<20x4xf32>
    %51 = vector.extract_strided_slice %45 {offsets = [0, 1], sizes = [20, 1], strides = [1, 1]} : vector<20x2xf32> to vector<20x1xf32>
    %c1 = arith.constant 1 : index
    %c0_22 = arith.constant 0 : index
    %c0_23 = arith.constant 0 : index
    %52 = vector.load %arg8[%c1, %c0_22, %c0_23] : memref<2x20x4xf32, #tpu.memory_space<vmem>>, vector<1x20x4xf32>
    %53 = vector.shape_cast %52 : vector<1x20x4xf32> to vector<20x4xf32>
    %54 = vector.broadcast %51 : vector<20x1xf32> to vector<20x4xf32>
    %55 = arith.mulf %54, %53 : vector<20x4xf32>
    %56 = arith.addf %50, %55 : vector<20x4xf32>
    %c0_24 = arith.constant 0 : index
    %c0_25 = arith.constant 0 : index
    %57 = vector.load %arg9[%c0_24, %c0_25] : memref<2x20xf32, #tpu.memory_space<vmem>>, vector<2x20xf32>
    %cst_26 = arith.constant dense<0.000000e+00> : vector<2x4xf32>
    %58 = tpu.matmul %57, %56, %cst_26 {dimension_numbers = #tpu.dot_dimension_numbers<[1], [0], [0], [1], [0, 0, 1, 1], [], []>} : vector<2x20xf32>, vector<20x4xf32>, vector<2x4xf32> -> vector<2x4xf32>
    %c0_27 = arith.constant 0 : index
    %c0_28 = arith.constant 0 : index
    %59 = vector.load %arg3[%c0_27, %c0_28] : memref<2x4xf32, #tpu.memory_space<vmem>>, vector<2x4xf32>
    %c0_29 = arith.constant 0 : index
    %c0_30 = arith.constant 0 : index
    %60 = vector.load %arg10[%c0_29, %c0_30] : memref<4x4xf32, #tpu.memory_space<vmem>>, vector<4x4xf32>
    %cst_31 = arith.constant dense<0.000000e+00> : vector<2x4xf32>
    %61 = tpu.matmul %59, %60, %cst_31 {dimension_numbers = #tpu.dot_dimension_numbers<[1], [0], [0], [1], [0, 0, 1, 1], [], []>} : vector<2x4xf32>, vector<4x4xf32>, vector<2x4xf32> -> vector<2x4xf32>
    %62 = arith.addf %58, %61 : vector<2x4xf32>
    %c0_32 = arith.constant 0 : index
    %c0_33 = arith.constant 0 : index
    %63 = vector.load %arg11[%c0_32, %c0_33] : memref<1x4xf32, #tpu.memory_space<vmem>>, vector<1x4xf32>
    %64 = vector.broadcast %11 : f32 to vector<1x4xf32>
    %65 = arith.mulf %64, %63 : vector<1x4xf32>
    %cst_34 = arith.constant 1.000000e+00 : f32
    %66 = arith.subf %cst_34, %11 : f32
    %67 = vector.broadcast %66 : f32 to vector<2x4xf32>
    %68 = arith.mulf %67, %62 : vector<2x4xf32>
    %69 = vector.broadcast %65 : vector<1x4xf32> to vector<2x4xf32>
    %70 = arith.addf %69, %68 : vector<2x4xf32>
    %cst_35 = arith.constant 1.000000e+06 : f32
    %71 = vector.broadcast %cst_35 : f32 to vector<2x4xf32>
    %72 = arith.mulf %71, %59 : vector<2x4xf32>
    %73 = arith.subf %70, %72 : vector<2x4xf32>
    %c0_36 = arith.constant 0 : index
    %c0_37 = arith.constant 0 : index
    %74 = vector.load %arg4[%c0_36, %c0_37] : memref<2x4xf32, #tpu.memory_space<vmem>>, vector<2x4xf32>
    %cst_38 = arith.constant 9.99999993E-9 : f32
    %75 = vector.broadcast %cst_38 : f32 to vector<2x4xf32>
    %76 = arith.addf %74, %75 : vector<2x4xf32>
    %77 = math.log %76 : vector<2x4xf32>
    %cst_39 = arith.constant 0.000000e+00 : f32
    %78 = vector.broadcast %cst_39 : f32 to vector<2x4xf32>
    %79 = arith.subf %78, %77 : vector<2x4xf32>
    %cst_40 = arith.constant 9.99999993E-9 : f32
    %80 = vector.broadcast %cst_40 : f32 to vector<2x4xf32>
    %81 = arith.addf %79, %80 : vector<2x4xf32>
    %82 = math.log %81 : vector<2x4xf32>
    %cst_41 = arith.constant 0.000000e+00 : f32
    %83 = vector.broadcast %cst_41 : f32 to vector<2x4xf32>
    %84 = arith.subf %83, %82 : vector<2x4xf32>
    %85 = arith.addf %73, %84 : vector<2x4xf32>
    %c0_42 = arith.constant 0 : index
    %86 = memref.load %arg0[%c0_42] : memref<1xf32, #tpu.memory_space<smem>>
    %87 = vector.broadcast %86 : f32 to vector<2x4xf32>
    %88 = arith.mulf %85, %87 : vector<2x4xf32>
    %cst_43 = arith.constant dense<0xFF800000> : vector<2xf32>
    %89 = vector.multi_reduction <maximumf>, %88, %cst_43 [1] : vector<2x4xf32> to vector<2xf32>
    %90 = vector.shape_cast %89 : vector<2xf32> to vector<2x1xf32>
    %91 = vector.broadcast %90 : vector<2x1xf32> to vector<2x4xf32>
    %92 = arith.subf %88, %91 : vector<2x4xf32>
    %93 = math.exp %92 : vector<2x4xf32>
    %cst_44 = arith.constant dense<0.000000e+00> : vector<2xf32>
    %94 = vector.multi_reduction <add>, %93, %cst_44 [1] : vector<2x4xf32> to vector<2xf32>
    %95 = vector.shape_cast %94 : vector<2xf32> to vector<2x1xf32>
    %96 = vector.broadcast %95 : vector<2x1xf32> to vector<2x4xf32>
    %97 = arith.divf %93, %96 : vector<2x4xf32>
    %cst_45 = arith.constant 1.000000e+01 : f32
    %98 = vector.broadcast %cst_45 : f32 to vector<2x4xf32>
    %99 = arith.mulf %73, %98 : vector<2x4xf32>
    %cst_46 = arith.constant dense<0xFF800000> : vector<2xf32>
    %100 = vector.multi_reduction <maximumf>, %99, %cst_46 [1] : vector<2x4xf32> to vector<2xf32>
    %101 = vector.shape_cast %100 : vector<2xf32> to vector<2x1xf32>
    %102 = vector.broadcast %101 : vector<2x1xf32> to vector<2x4xf32>
    %103 = arith.subf %99, %102 : vector<2x4xf32>
    %104 = math.exp %103 : vector<2x4xf32>
    %cst_47 = arith.constant dense<0.000000e+00> : vector<2xf32>
    %105 = vector.multi_reduction <add>, %104, %cst_47 [1] : vector<2x4xf32> to vector<2xf32>
    %106 = vector.shape_cast %105 : vector<2xf32> to vector<2x1xf32>
    %107 = vector.broadcast %106 : vector<2x1xf32> to vector<2x4xf32>
    %108 = arith.divf %104, %107 : vector<2x4xf32>
    %cst_48 = arith.constant 1.000000e+01 : f32
    %109 = vector.broadcast %cst_48 : f32 to vector<2x4xf32>
    %110 = arith.mulf %85, %109 : vector<2x4xf32>
    %cst_49 = arith.constant dense<0xFF800000> : vector<2xf32>
    %111 = vector.multi_reduction <maximumf>, %110, %cst_49 [1] : vector<2x4xf32> to vector<2xf32>
    %112 = vector.shape_cast %111 : vector<2xf32> to vector<2x1xf32>
    %113 = vector.broadcast %112 : vector<2x1xf32> to vector<2x4xf32>
    %114 = arith.subf %110, %113 : vector<2x4xf32>
    %115 = math.exp %114 : vector<2x4xf32>
    %cst_50 = arith.constant dense<0.000000e+00> : vector<2xf32>
    %116 = vector.multi_reduction <add>, %115, %cst_50 [1] : vector<2x4xf32> to vector<2xf32>
    %117 = vector.shape_cast %116 : vector<2xf32> to vector<2x1xf32>
    %118 = vector.broadcast %117 : vector<2x1xf32> to vector<2x4xf32>
    %119 = arith.divf %115, %118 : vector<2x4xf32>
    %120 = vector.broadcast %11 : f32 to vector<2x4xf32>
    %121 = arith.mulf %120, %119 : vector<2x4xf32>
    %cst_51 = arith.constant 1.000000e+00 : f32
    %122 = arith.subf %cst_51, %11 : f32
    %123 = vector.broadcast %122 : f32 to vector<2x4xf32>
    %124 = arith.mulf %123, %108 : vector<2x4xf32>
    %125 = arith.addf %121, %124 : vector<2x4xf32>
    %c0_52 = arith.constant 0 : index
    %c0_53 = arith.constant 0 : index
    %126 = vector.load %arg12[%c0_52, %c0_53] : memref<2x4xf32, #tpu.memory_space<vmem>>, vector<2x4xf32>
    tpu.vector_store %arg12[%c0_52, %c0_53], %97 {strides = array<i32>} : memref<2x4xf32, #tpu.memory_space<vmem>>, vector<2x4xf32>,
    %c0_54 = arith.constant 0 : index
    %c0_55 = arith.constant 0 : index
    %127 = vector.load %arg13[%c0_54, %c0_55] : memref<2x4xf32, #tpu.memory_space<vmem>>, vector<2x4xf32>
    tpu.vector_store %arg13[%c0_54, %c0_55], %125 {strides = array<i32>} : memref<2x4xf32, #tpu.memory_space<vmem>>, vector<2x4xf32>,
    return
  }
}

</mosaic_0001>

<llo_original>
// kernel: tile.13
$region0: #{tile.13}
  #allocation0 [shape = 's32[1]{0}', space=sflag, size = 0x4, scoped, tag = 'scoped memory for tile.13']
  %s0 = inlined_call_operand.vmem [shape: f32[10], index: 0, kind: input, shape index: {}]
  %s1 = inlined_call_operand.vmem [shape: f32[2,10], index: 1, kind: output, shape index: {}]
  // Predicated region
  $region2: #{tile.13} parent=0 // pred_check
    _
  $region3: #{tile.13} parent=0 // pred_check_branch
    %3 = sbr.rel (0) target = $region5
  $region4: #{tile.13} parent=0 // pred_region
    _
  $region5: #{tile.13} parent=0 // pred_fallthru
    _
  %v4 = vld [vmem:[%s0] ss:$0 sm:$0xff]
  %5 = vst [vmem:[%s1] sm:$0x3] %v4

// kernel: tile.0
$region0: #{tile.0}
  %s0 = inlined_call_operand.vmem [shape: f32[2,10], index: 0, kind: input, shape index: {}]
  %s1 = inlined_call_operand.vmem [shape: f32[20,1], index: 1, kind: output, shape index: {}]
  $region1: #{tile.0} parent=0
    #allocation0 [shape = 'u8[4096]{0}', space=vmem, size = 0x1000, scoped, tag = 'scoped mem for input reshape']
    %s3 = sshllo.u32 0, 2
    %v4 = vld [vmem:[%s0] sm:%s3]
    %5 = vst [vmem:[#allocation0] sm:%s3] %v4
    %v6 = vld [vmem:[#allocation0] sm:$0x3]
    %vm7 = vcmask 7168
    %8 = vst.msk [vmem:[%s1] ss:$10 sm:$0x3] %vm7, %v6
    %v9 = vld [vmem:[#allocation0] sm:$0x3]
    %10 = vrot.lane.b32.xlu0 %v9, 127
    %v11 = vpop.permute.xlu0 %10
    %vm12 = vcmask 7168
    %s13 = scalar_lea.vmem %s1, 1
    %14 = vst.msk [vmem:[%s13] ss:$10 sm:$0x3] %vm12, %v11
    %v15 = vld [vmem:[#allocation0] sm:$0x3]
    %16 = vrot.lane.b32.xlu0 %v15, 126
    %v17 = vpop.permute.xlu0 %16
    %vm18 = vcmask 7168
    %s19 = scalar_lea.vmem %s1, 2
    %20 = vst.msk [vmem:[%s19] ss:$10 sm:$0x3] %vm18, %v17
    %v21 = vld [vmem:[#allocation0] sm:$0x3]
    %22 = vrot.lane.b32.xlu0 %v21, 125
    %v23 = vpop.permute.xlu0 %22
    %vm24 = vcmask 7168
    %s25 = scalar_lea.vmem %s1, 3
    %26 = vst.msk [vmem:[%s25] ss:$10 sm:$0x3] %vm24, %v23
    %v27 = vld [vmem:[#allocation0] sm:$0x3]
    %28 = vrot.lane.b32.xlu0 %v27, 124
    %v29 = vpop.permute.xlu0 %28
    %vm30 = vcmask 7168
    %s31 = scalar_lea.vmem %s1, 4
    %32 = vst.msk [vmem:[%s31] ss:$10 sm:$0x3] %vm30, %v29
    %v33 = vld [vmem:[#allocation0] sm:$0x3]
    %34 = vrot.lane.b32.xlu0 %v33, 123
    %v35 = vpop.permute.xlu0 %34
    %vm36 = vcmask 7168
    %s37 = scalar_lea.vmem %s1, 5
    %38 = vst.msk [vmem:[%s37] ss:$10 sm:$0x3] %vm36, %v35
    %v39 = vld [vmem:[#allocation0] sm:$0x3]
    %40 = vrot.lane.b32.xlu0 %v39, 122
    %v41 = vpop.permute.xlu0 %40
    %vm42 = vcmask 7168
    %s43 = scalar_lea.vmem %s1, 6
    %44 = vst.msk [vmem:[%s43] ss:$10 sm:$0x3] %vm42, %v41
    %v45 = vld [vmem:[#allocation0] sm:$0x3]
    %46 = vrot.lane.b32.xlu0 %v45, 121
    %v47 = vpop.permute.xlu0 %46
    %vm48 = vcmask 7168
    %s49 = scalar_lea.vmem %s1, 7
    %50 = vst.msk [vmem:[%s49] ss:$10 sm:$0x3] %vm48, %v47
    %v51 = vld [vmem:[#allocation0] sm:$0x3]
    %52 = vrot.lane.b32.xlu0 %v51, 120
    %v53 = vpop.permute.xlu0 %52
    %vm54 = vcmask 7168
    %s55 = scalar_lea.vmem %s1, 8
    %56 = vst.msk [vmem:[%s55] ss:$10 sm:$0x3] %vm54, %v53
    %v57 = vld [vmem:[#allocation0] sm:$0x3]
    %58 = vrot.lane.b32.xlu0 %v57, 119
    %v59 = vpop.permute.xlu0 %58
    %vm60 = vcmask 7168
    %s61 = scalar_lea.vmem %s1, 9
    %62 = vst.msk [vmem:[%s61] ss:$10 sm:$0x3] %vm60, %v59

// kernel: tile.19
$region0: #{tile.19}
  %s0 = inlined_call_operand.vmem [shape: f32[2,2,10,4], index: 0, kind: input, shape index: {}]
  %s1 = inlined_call_operand.vmem [shape: f32[2,20,4], index: 1, kind: output, shape index: {}]
  $region1: #{tile.19} parent=0
    #allocation0 [shape = 'u8[8192]{0}', space=vmem, size = 0x2000, scoped, tag = 'scoped mem for output reshape']
    #allocation1 [shape = 'u8[32768]{0}', space=vmem, size = 0x8000, scoped, tag = 'scoped mem for input reshape']
    %s3 = sshllo.u32 0, 2
    %s4 = smul.addr 2, 7
    %s5 = scalar_lea.vmem %s0, %s4
    %v6 = vld [vmem:[%s5] sm:%s3]
    %s7 = scalar_lea.vmem [#allocation1], 56
    %8 = vst [vmem:[%s7] sm:%s3] %v6
    %s9 = smul.addr 2, 6
    %s10 = scalar_lea.vmem %s0, %s9
    %v11 = vld [vmem:[%s10] sm:%s3]
    %s12 = scalar_lea.vmem [#allocation1], 48
    %13 = vst [vmem:[%s12] sm:%s3] %v11
    %s14 = smul.addr 2, 5
    %s15 = scalar_lea.vmem %s0, %s14
    %v16 = vld [vmem:[%s15] sm:%s3]
    %s17 = scalar_lea.vmem [#allocation1], 40
    %18 = vst [vmem:[%s17] sm:%s3] %v16
    %s19 = smul.addr 2, 4
    %s20 = scalar_lea.vmem %s0, %s19
    %v21 = vld [vmem:[%s20] sm:%s3]
    %s22 = scalar_lea.vmem [#allocation1], 32
    %23 = vst [vmem:[%s22] sm:%s3] %v21
    %s24 = smul.addr 2, 3
    %s25 = scalar_lea.vmem %s0, %s24
    %v26 = vld [vmem:[%s25] sm:%s3]
    %s27 = scalar_lea.vmem [#allocation1], 24
    %28 = vst [vmem:[%s27] sm:%s3] %v26
    %s29 = smul.addr 2, 2
    %s30 = scalar_lea.vmem %s0, %s29
    %v31 = vld [vmem:[%s30] sm:%s3]
    %s32 = scalar_lea.vmem [#allocation1], 16
    %33 = vst [vmem:[%s32] sm:%s3] %v31
    %s34 = scalar_lea.vmem %s0, 2
    %v35 = vld [vmem:[%s34] sm:%s3]
    %s36 = scalar_lea.vmem [#allocation1], 8
    %37 = vst [vmem:[%s36] sm:%s3] %v35
    %v38 = vld [vmem:[%s0] sm:%s3]
    %39 = vst [vmem:[#allocation1] sm:%s3] %v38
    %v40 = vld [vmem:[#allocation1] ss:$8 sm:$0xf]
    %v41 = vld [vmem:[#allocation1] ss:$8 sm:$0xf0]
    %vm42 = vcmask 1047556
    %v43 = vsel %vm42, %v41, %v40
    %vm44 = vcmask 80896
    %45 = vst.msk [vmem:[#allocation0] sm:$0xf] %vm44, %v43
    %s46 = scalar_lea.vmem [#allocation0], 4
    %47 = vst.msk [vmem:[%s46] sm:$0xf0] %vm44, %v43
    %s48 = scalar_lea.vmem [#allocation1], 1
    %v49 = vld [vmem:[%s48] ss:$8 sm:$0xf]
    %s50 = scalar_lea.vmem [#allocation1], 1
    %v51 = vld [vmem:[%s50] ss:$8 sm:$0xf0]
    %vm52 = vcmask 1047556
    %v53 = vsel %vm52, %v51, %v49
    %54 = vrot.lane.b32.xlu0 %v53, 10
    %v55 = vpop.permute.xlu0 %54
    %vm56 = vcmask 162896
    %57 = vst.msk [vmem:[#allocation0] sm:$0xf] %vm56, %v55
    %s58 = scalar_lea.vmem [#allocation0], 4
    %59 = vst.msk [vmem:[%s58] sm:$0xf0] %vm56, %v55
    %s61 = sshllo.u32 0, 4
    %v63 = vld [vmem:[#allocation0] sm:%s61]
    %s64 = sshllo.u32 0, 4
    %65 = vst [vmem:[%s1] sm:%s64] %v63
    %s66 = scalar_lea.vmem [#allocation0], 8
    %v67 = vld [vmem:[%s66] sm:%s61]
    %s68 = sshllo.u32 0, 4
    %s69 = scalar_lea.vmem %s1, 4
    %70 = vst [vmem:[%s69] sm:%s68] %v67

// kernel: policy_selector_forward.1
$region0: #{policy_selector_forward.1}
  #allocation0 [shape = 'u32[]', space=smem, size = 0x4, offset = 0x4, fixed_abs, tag = 'smem constant byte address 0x4 - core index']
  #allocation1 [shape = 'u32[144,128]{1,0:T(1,128)}', space=vmem, size = 0x12000, scoped, tag = 'internal scratch']
  #allocation2 [shape = 'f32[8,106]{1,0:T(8,128)}', space=vmem, size = 0x1000, scoped, tag = 'scratch operand']
  #allocation3 [shape = 'f32[1]{0:T(128)S(6)}', space=smem, size = 0x200, scoped, tag = 'scoped memory for policy_selector_forward.1']
  %s0 = inlined_call_operand.<no memory space> [shape: f32[1], index: 0, kind: input, shape index: {}]
  %s1 = inlined_call_operand.vmem [shape: f32[8,90], index: 1, kind: input, shape index: {}]
  %s2 = inlined_call_operand.vmem [shape: f32[8,1], index: 2, kind: input, shape index: {}]
  %s3 = inlined_call_operand.vmem [shape: f32[2,4], index: 3, kind: input, shape index: {}]
  %s4 = inlined_call_operand.vmem [shape: f32[2,4], index: 4, kind: input, shape index: {}]
  %s5 = inlined_call_operand.vmem [shape: f32[20,136], index: 5, kind: input, shape index: {}]
  %s6 = inlined_call_operand.vmem [shape: f32[20,1], index: 6, kind: input, shape index: {}]
  %s7 = inlined_call_operand.vmem [shape: f32[90,2], index: 7, kind: input, shape index: {}]
  %s8 = inlined_call_operand.vmem [shape: f32[2,20,4], index: 8, kind: input, shape index: {}]
  %s9 = inlined_call_operand.vmem [shape: f32[2,20], index: 9, kind: input, shape index: {}]
  %s10 = inlined_call_operand.vmem [shape: f32[4,4], index: 10, kind: input, shape index: {}]
  %s11 = inlined_call_operand.vmem [shape: f32[1,4], index: 11, kind: input, shape index: {}]
  %s12 = inlined_call_operand.hbm [shape: f32[2,4], index: 12, kind: output, shape index: {0}]
  %s13 = inlined_call_operand.hbm [shape: f32[2,4], index: 13, kind: output, shape index: {1}]
  %14 = xla_tuple %s12, %s13
  %s15 = sld [smem:[#allocation0]]
  $region66: #{policy_selector_forward.1} parent=0
    _
  %s17 = ssub.s32 1, %s15
  %s18 = scalar_select 0, %s17, %s15
  %19 = sst [smem:[#allocation3]] %s0
  $region1: #{policy_selector_forward.1} parent=0
    #allocation4 [shape = 'u8[1024]{0}', space=vmem, size = 0x400, scoped, tag = 'output window, operand 0, single buffered']
    #allocation5 [shape = 's32[1]{0}', space=sflag, size = 0x4, scoped, tag = 'scoped memory for policy_selector_forward.1']
    #allocation6 [shape = 'u8[1024]{0}', space=vmem, size = 0x400, scoped, tag = 'output window, operand 1, single buffered']
    #allocation7 [shape = 's32[1]{0}', space=sflag, size = 0x4, scoped, tag = 'scoped memory for policy_selector_forward.1']
    %20 = vsyncpa [#allocation5], 0
    %21 = vsyncpa [#allocation7], 0
    // Predicated region
    $region2: #{policy_selector_forward.1} parent=1 // pred_check
      _
    $region3: #{policy_selector_forward.1} parent=1 // pred_check_branch
      %23 = sbr.rel (0) target = $region5
    $region4: #{policy_selector_forward.1} parent=1 // pred_region
      _
    $region5: #{policy_selector_forward.1} parent=1 // pred_fallthru
      _
    // Predicated region
    $region6: #{policy_selector_forward.1} parent=1 // pred_check
      _
    $region7: #{policy_selector_forward.1} parent=1 // pred_check_branch
      %25 = sbr.rel (0) target = $region9
    $region8: #{policy_selector_forward.1} parent=1 // pred_region
      _
    $region9: #{policy_selector_forward.1} parent=1 // pred_fallthru
      _
    // Predicated region
    $region10: #{policy_selector_forward.1} parent=1 // pred_check
      _
    $region11: #{policy_selector_forward.1} parent=1 // pred_check_branch
      %27 = sbr.rel (0) target = $region13
    $region12: #{policy_selector_forward.1} parent=1 // pred_region
      _
    $region13: #{policy_selector_forward.1} parent=1 // pred_fallthru
      _
    // Predicated region
    $region14: #{policy_selector_forward.1} parent=1 // pred_check
      _
    $region15: #{policy_selector_forward.1} parent=1 // pred_check_branch
      %29 = sbr.rel (0) target = $region17
    $region16: #{policy_selector_forward.1} parent=1 // pred_region
      _
    $region17: #{policy_selector_forward.1} parent=1 // pred_fallthru
      _
    // Predicated region
    $region18: #{policy_selector_forward.1} parent=1 // pred_check
      _
    $region19: #{policy_selector_forward.1} parent=1 // pred_check_branch
      %31 = sbr.rel (0) target = $region21
    $region20: #{policy_selector_forward.1} parent=1 // pred_region
      _
    $region21: #{policy_selector_forward.1} parent=1 // pred_fallthru
      _
    // Predicated region
    $region22: #{policy_selector_forward.1} parent=1 // pred_check
      _
    $region23: #{policy_selector_forward.1} parent=1 // pred_check_branch
      %33 = sbr.rel (0) target = $region25
    $region24: #{policy_selector_forward.1} parent=1 // pred_region
      _
    $region25: #{policy_selector_forward.1} parent=1 // pred_fallthru
      _
    // Predicated region
    $region26: #{policy_selector_forward.1} parent=1 // pred_check
      _
    $region27: #{policy_selector_forward.1} parent=1 // pred_check_branch
      %35 = sbr.rel (0) target = $region29
    $region28: #{policy_selector_forward.1} parent=1 // pred_region
      _
    $region29: #{policy_selector_forward.1} parent=1 // pred_fallthru
      _
    // Predicated region
    $region30: #{policy_selector_forward.1} parent=1 // pred_check
      _
    $region31: #{policy_selector_forward.1} parent=1 // pred_check_branch
      %37 = sbr.rel (0) target = $region33
    $region32: #{policy_selector_forward.1} parent=1 // pred_region
      _
    $region33: #{policy_selector_forward.1} parent=1 // pred_fallthru
      _
    // Predicated region
    $region34: #{policy_selector_forward.1} parent=1 // pred_check
      _
    $region35: #{policy_selector_forward.1} parent=1 // pred_check_branch
      %39 = sbr.rel (0) target = $region37
    $region36: #{policy_selector_forward.1} parent=1 // pred_region
      _
    $region37: #{policy_selector_forward.1} parent=1 // pred_fallthru
      _
    // Predicated region
    $region38: #{policy_selector_forward.1} parent=1 // pred_check
      _
    $region39: #{policy_selector_forward.1} parent=1 // pred_check_branch
      %41 = sbr.rel (0) target = $region41
    $region40: #{policy_selector_forward.1} parent=1 // pred_region
      _
    $region41: #{policy_selector_forward.1} parent=1 // pred_fallthru
      _
    // Predicated region
    $region42: #{policy_selector_forward.1} parent=1 // pred_check
      _
    $region43: #{policy_selector_forward.1} parent=1 // pred_check_branch
      %43 = sbr.rel (0) target = $region45
    $region44: #{policy_selector_forward.1} parent=1 // pred_region
      _
    $region45: #{policy_selector_forward.1} parent=1 // pred_fallthru
      _
    // Predicated region
    $region46: #{policy_selector_forward.1} parent=1 // pred_check
      _
    $region47: #{policy_selector_forward.1} parent=1 // pred_check_branch
      %45 = sbr.rel (0) target = $region49
    $region48: #{policy_selector_forward.1} parent=1 // pred_region
      _
    $region49: #{policy_selector_forward.1} parent=1 // pred_fallthru
      _
    %v46 = vld [vmem:[%s1] sm:$0xff]
    %v47 = vld [vmem:[%s2] sm:$0xff]
    %49 = vset.pattern.permute.xlu0 0
    %50 = vperm.xlu0 %49, %v47
    %v51 = vpop.permute.xlu0 %50
    %v53 = vmul.f32 %v46, %v51
    %v54 = vand.u32 2147483647, %v53
    %vm55 = vcmask 736256
    %v56 = vsel %vm55, %v54, 0.0
    %57 = vadd.xlane.f32.xlu0 %v56
    %v58 = vpop.xlane.xlu0 %57
    %v59 = vrot.slane %v58, 4
    %v60 = vadd.f32 %v58, %v59
    %v61 = vrot.slane %v60, 2
    %v62 = vadd.f32 %v60, %v61
    %v63 = vrot.slane %v62, 1
    %v64 = vadd.f32 %v62, %v63
    %s65 = vtos %v64
    %p66 = scmp.lt.f32.partialorder %s65, 1e-16
    %s67 = scalar_select %p66, 1, 0
    %s68 = scvt.s32.f32 %s67
    %vm69 = vcmask 867328
    %70 = vst.msk [vmem:[#allocation2] sm:$0xff] %vm69, 0.0
    %72 = vrot.lane.b32.xlu0 %v53, 8
    %v73 = vpop.permute.xlu0 %72
    %vm75 = vcmask 801856
    %76 = vst.msk [vmem:[#allocation2] sm:$0xff] %vm75, %v73
    %v77 = vld [vmem:[#allocation2] sm:$0xff]
    %79 = vrot.lane.b32.xlu0 %v77, 127
    %v80 = vpop.permute.xlu0 %79
    %82 = vrot.lane.b32.xlu0 %v77, 126
    %v83 = vpop.permute.xlu0 %82
    %85 = vrot.lane.b32.xlu0 %v77, 125
    %v86 = vpop.permute.xlu0 %85
    %88 = vrot.lane.b32.xlu0 %v77, 124
    %v89 = vpop.permute.xlu0 %88
    %91 = vrot.lane.b32.xlu0 %v77, 123
    %v92 = vpop.permute.xlu0 %91
    %94 = vrot.lane.b32.xlu0 %v77, 122
    %v95 = vpop.permute.xlu0 %94
    %97 = vrot.lane.b32.xlu0 %v77, 121
    %v98 = vpop.permute.xlu0 %97
    %100 = vrot.lane.b32.xlu0 %v77, 120
    %v101 = vpop.permute.xlu0 %100
    %103 = vrot.lane.b32.xlu0 %v77, 119
    %v104 = vpop.permute.xlu0 %103
    %106 = vrot.lane.b32.xlu0 %v77, 118
    %v107 = vpop.permute.xlu0 %106
    %109 = vrot.lane.b32.xlu0 %v77, 117
    %v110 = vpop.permute.xlu0 %109
    %112 = vrot.lane.b32.xlu0 %v77, 116
    %v113 = vpop.permute.xlu0 %112
    %115 = vrot.lane.b32.xlu0 %v77, 115
    %v116 = vpop.permute.xlu0 %115
    %118 = vrot.lane.b32.xlu0 %v77, 114
    %v119 = vpop.permute.xlu0 %118
    %121 = vrot.lane.b32.xlu0 %v77, 113
    %v122 = vpop.permute.xlu0 %121
    %124 = vrot.lane.b32.xlu0 %v77, 112
    %v125 = vpop.permute.xlu0 %124
    %v127 = vld [vmem:[%s5] sm:$0xff]
    %v128 = vld [vmem:[%s5 + $0x8] sm:$0xff]
    %v129 = vld [vmem:[%s5 + $0x10] sm:$0xff]
    %v130 = vld [vmem:[%s5 + $0x18] sm:$0xff]
    %v131 = vld [vmem:[%s5 + $0x20] sm:$0xf]
    %v132 = vld [vmem:[%s5 + $0x28] sm:$0xf]
    %v133 = vld [vmem:[%s6] sm:$0xff]
    %v134 = vld [vmem:[%s6 + $0x8] sm:$0xff]
    %v135 = vld [vmem:[%s6 + $0x10] sm:$0xf]
    %137 = vset.pattern.permute.xlu0 0
    %138 = vperm.xlu0 %137, %v133
    %v139 = vpop.permute.xlu0 %138
    %142 = vset.pattern.permute.xlu0 0
    %143 = vperm.xlu0 %142, %v134
    %v144 = vpop.permute.xlu0 %143
    %147 = vset.pattern.permute.xlu0 0
    %148 = vperm.xlu0 %147, %v135
    %v149 = vpop.permute.xlu0 %148
    %vm151 = vcmask 64512
    %v153 = vsel %vm151, %v128, 0
    %v156 = vsel %vm151, %v130, 0
    %v159 = vsel %vm151, %v132, 0
    %161 = vmatprep.subr.mxu0 0.0
    %162 = vmatpush1.msra.mxu0 %v77
    %163 = vmatprep.subr.mxu0 0.0
    %164 = vmatpush1.msra.mxu0 %v80
    %165 = vmatprep.subr.mxu0 0.0
    %166 = vmatpush1.msra.mxu0 %v83
    %167 = vmatprep.subr.mxu0 0.0
    %168 = vmatpush1.msra.mxu0 %v86
    %169 = vmatprep.subr.mxu0 0.0
    %170 = vmatpush1.msra.mxu0 %v89
    %171 = vmatprep.subr.mxu0 0.0
    %172 = vmatpush1.msra.mxu0 %v92
    %173 = vmatprep.subr.mxu0 0.0
    %174 = vmatpush1.msra.mxu0 %v95
    %175 = vmatprep.subr.mxu0 0.0
    %176 = vmatpush1.msra.mxu0 %v98
    %177 = vmatprep.subr.mxu0 0.0
    %178 = vmatpush1.msra.mxu0 %v101
    %179 = vmatprep.subr.mxu0 0.0
    %180 = vmatpush1.msra.mxu0 %v104
    %181 = vmatprep.subr.mxu0 0.0
    %182 = vmatpush1.msra.mxu0 %v107
    %183 = vmatprep.subr.mxu0 0.0
    %184 = vmatpush1.msra.mxu0 %v110
    %185 = vmatprep.subr.mxu0 0.0
    %186 = vmatpush1.msra.mxu0 %v113
    %187 = vmatprep.subr.mxu0 0.0
    %188 = vmatpush1.msra.mxu0 %v116
    %189 = vmatprep.subr.mxu0 0.0
    %190 = vmatpush1.msra.mxu0 %v119
    %191 = vmatprep.subr.mxu0 0.0
    %192 = vmatpush1.msra.mxu0 %v122
    %193 = vmatprep.subr.mxu0 0.0
    %194 = vmatpush1.msra.mxu0 %v125
    %195 = vmatprep.subr.mxu0 0.0
    %196 = vmatpush1.msra.mxu0 0.0
    %197 = vmatprep.subr.mxu0 0.0
    %198 = vmatpush1.msra.mxu0 0.0
    %199 = vmatprep.subr.mxu0 0.0
    %200 = vmatpush1.msra.mxu0 0.0
    %201 = vmatprep.subr.mxu0 0.0
    %202 = vmatpush1.msra.mxu0 0.0
    %203 = vmatprep.subr.mxu0 0.0
    %204 = vmatpush1.msra.mxu0 0.0
    %205 = vmatprep.subr.mxu0 0.0
    %206 = vmatpush1.msra.mxu0 0.0
    %207 = vmatprep.subr.mxu0 0.0
    %208 = vmatpush1.msra.mxu0 0.0
    %209 = vmatprep.subr.mxu0 0.0
    %210 = vmatpush1.msra.mxu0 0.0
    %211 = vmatprep.subr.mxu0 0.0
    %212 = vmatpush1.msra.mxu0 0.0
    %213 = vmatprep.subr.mxu0 0.0
    %214 = vmatpush1.msra.mxu0 0.0
    %215 = vmatprep.subr.mxu0 0.0
    %216 = vmatpush1.msra.mxu0 0.0
    %217 = vmatprep.subr.mxu0 0.0
    %218 = vmatpush1.msra.mxu0 0.0
    %219 = vmatprep.subr.mxu0 0.0
    %220 = vmatpush1.msra.mxu0 0.0
    %221 = vmatprep.subr.mxu0 0.0
    %222 = vmatpush1.msra.mxu0 0.0
    %223 = vmatprep.subr.mxu0 0.0
    %224 = vmatpush1.msra.mxu0 0.0
    %225 = vmatprep.mubr.f32.mxu0 %v153
    %226 = vmatmul.mubr.f32.gmra.mrb[0].mxu0 %v127
    %v227 = vpop.f32.mrb[0].mxu0
    %v228 = vadd.f32 %v139, %v227
    %v229 = vpop.f32.mrb[0].mxu0
    %230 = vmatprep.mubr.f32.mxu0 %v156
    %231 = vmatmul.mubr.f32.gmra.mrb[0].mxu0 %v129
    %v232 = vpop.f32.mrb[0].mxu0
    %v233 = vadd.f32 %v144, %v232
    %v234 = vpop.f32.mrb[0].mxu0
    %235 = vmatprep.mubr.f32.mxu0 %v159
    %236 = vmatmul.mubr.f32.gmra.mrb[0].mxu0 %v131
    %v237 = vpop.f32.mrb[0].mxu0
    %v238 = vadd.f32 %v149, %v237
    %v239 = vpop.f32.mrb[0].mxu0
    %240 = vdwg.mxu0
    %v241 = vmul.f32 %v228, %v228
    %v242 = vmul.f32 %v233, %v233
    %v243 = vmul.f32 %v238, %v238
    %v244 = vld [vmem:[%s7] sm:$0xff]
    %v245 = vld [vmem:[%s7 + $0x8] sm:$0xff]
    %v246 = vld [vmem:[%s7 + $0x10] sm:$0xff]
    %v247 = vld [vmem:[%s7 + $0x18] sm:$0xff]
    %v248 = vld [vmem:[%s7 + $0x20] sm:$0xff]
    %v249 = vld [vmem:[%s7 + $0x28] sm:$0xff]
    %v250 = vld [vmem:[%s7 + $0x30] sm:$0xff]
    %v251 = vld [vmem:[%s7 + $0x38] sm:$0xff]
    %v252 = vld [vmem:[%s7 + $0x40] sm:$0xff]
    %v253 = vld [vmem:[%s7 + $0x48] sm:$0xff]
    %v254 = vld [vmem:[%s7 + $0x50] sm:$0xff]
    %v255 = vld [vmem:[%s7 + $0x58] sm:$0x3]
    %v257 = vsel %vm55, %v241, 0
    %v260 = vsel %vm55, %v242, 0
    %v263 = vsel %vm55, %v243, 0
    %vm265 = vcmask 1041408
    %v267 = vsel %vm265, %v255, 0
    %269 = vmatprep.subr.mxu0 0.0
    %270 = vmatpush1.msra.mxu0 %v244
    %271 = vmatprep.subr.mxu0 0.0
    %272 = vmatpush1.msra.mxu0 %v245
    %273 = vmatprep.subr.mxu0 0.0
    %274 = vmatpush1.msra.mxu0 %v246
    %275 = vmatprep.subr.mxu0 0.0
    %276 = vmatpush1.msra.mxu0 %v247
    %277 = vmatprep.subr.mxu0 0.0
    %278 = vmatpush1.msra.mxu0 %v248
    %279 = vmatprep.subr.mxu0 0.0
    %280 = vmatpush1.msra.mxu0 %v249
    %281 = vmatprep.subr.mxu0 0.0
    %282 = vmatpush1.msra.mxu0 %v250
    %283 = vmatprep.subr.mxu0 0.0
    %284 = vmatpush1.msra.mxu0 %v251
    %285 = vmatprep.subr.mxu0 0.0
    %286 = vmatpush1.msra.mxu0 %v252
    %287 = vmatprep.subr.mxu0 0.0
    %288 = vmatpush1.msra.mxu0 %v253
    %289 = vmatprep.subr.mxu0 0.0
    %290 = vmatpush1.msra.mxu0 %v254
    %291 = vmatprep.subr.mxu0 0.0
    %292 = vmatpush1.msra.mxu0 %v267
    %293 = vmatprep.subr.mxu0 0.0
    %294 = vmatpush1.msra.mxu0 0.0
    %295 = vmatprep.subr.mxu0 0.0
    %296 = vmatpush1.msra.mxu0 0.0
    %297 = vmatprep.subr.mxu0 0.0
    %298 = vmatpush1.msra.mxu0 0.0
    %299 = vmatprep.subr.mxu0 0.0
    %300 = vmatpush1.msra.mxu0 0.0
    %301 = vmatprep.subr.mxu0 0.0
    %302 = vmatpush1.msra.mxu0 0.0
    %303 = vmatprep.subr.mxu0 0.0
    %304 = vmatpush1.msra.mxu0 0.0
    %305 = vmatprep.subr.mxu0 0.0
    %306 = vmatpush1.msra.mxu0 0.0
    %307 = vmatprep.subr.mxu0 0.0
    %308 = vmatpush1.msra.mxu0 0.0
    %309 = vmatprep.subr.mxu0 0.0
    %310 = vmatpush1.msra.mxu0 0.0
    %311 = vmatprep.subr.mxu0 0.0
    %312 = vmatpush1.msra.mxu0 0.0
    %313 = vmatprep.subr.mxu0 0.0
    %314 = vmatpush1.msra.mxu0 0.0
    %315 = vmatprep.subr.mxu0 0.0
    %316 = vmatpush1.msra.mxu0 0.0
    %317 = vmatprep.subr.mxu0 0.0
    %318 = vmatpush1.msra.mxu0 0.0
    %319 = vmatprep.subr.mxu0 0.0
    %320 = vmatpush1.msra.mxu0 0.0
    %321 = vmatprep.subr.mxu0 0.0
    %322 = vmatpush1.msra.mxu0 0.0
    %323 = vmatprep.subr.mxu0 0.0
    %324 = vmatpush1.msra.mxu0 0.0
    %325 = vmatprep.subr.mxu0 0.0
    %326 = vmatpush1.msra.mxu0 0.0
    %327 = vmatprep.subr.mxu0 0.0
    %328 = vmatpush1.msra.mxu0 0.0
    %329 = vmatprep.subr.mxu0 0.0
    %330 = vmatpush1.msra.mxu0 0.0
    %331 = vmatprep.subr.mxu0 0.0
    %332 = vmatpush1.msra.mxu0 0.0
    %333 = vmatprep.mubr.f32.mxu0 0.0
    %334 = vmatmul.mubr.f32.gmra.mrb[0].mxu0 %v257
    %v335 = vpop.f32.mrb[0].mxu0
    %v336 = vadd.f32 0.0, %v335
    %v337 = vpop.f32.mrb[0].mxu0
    %338 = vmatprep.mubr.f32.mxu0 0.0
    %339 = vmatmul.mubr.f32.gmra.mrb[0].mxu0 %v260
    %v340 = vpop.f32.mrb[0].mxu0
    %v341 = vadd.f32 0.0, %v340
    %v342 = vpop.f32.mrb[0].mxu0
    %343 = vmatprep.mubr.f32.mxu0 0.0
    %344 = vmatmul.mubr.f32.gmra.mrb[0].mxu0 %v263
    %v345 = vpop.f32.mrb[0].mxu0
    %v346 = vadd.f32 0.0, %v345
    %v347 = vpop.f32.mrb[0].mxu0
    %348 = vdwg.mxu0
    %v349 = vmax.f32 %v336, 1e-10
    %v350 = vmax.f32 %v341, 1e-10
    %v351 = vmax.f32 %v346, 1e-10
    %v352 = vlog2.pop %v349
    %v353 = vmul.f32 %v352, 0.6931472
    %v354 = vlog2.pop %v350
    %v355 = vmul.f32 %v354, 0.6931472
    %v356 = vlog2.pop %v351
    %v357 = vmul.f32 %v356, 0.6931472
    %v358 = vld [vmem:[%s8] sm:$0xff]
    %v359 = vld [vmem:[%s8 + $0x8] sm:$0xff]
    %v360 = vld [vmem:[%s8 + $0x10] sm:$0xf]
    %362 = vset.pattern.permute.xlu0 0
    %363 = vperm.xlu0 %362, %v353
    %v364 = vpop.permute.xlu0 %363
    %367 = vset.pattern.permute.xlu0 0
    %368 = vperm.xlu0 %367, %v355
    %v369 = vpop.permute.xlu0 %368
    %372 = vset.pattern.permute.xlu0 0
    %373 = vperm.xlu0 %372, %v357
    %v374 = vpop.permute.xlu0 %373
    %v376 = vmul.f32 %v364, %v358
    %v377 = vmul.f32 %v369, %v359
    %v378 = vmul.f32 %v374, %v360
    %s379 = scalar_lea.vmem %s8, 24
    %v380 = vld [vmem:[%s379] sm:$0xff]
    %v381 = vld [vmem:[%s379 + $0x8] sm:$0xff]
    %v382 = vld [vmem:[%s379 + $0x10] sm:$0xf]
    %383 = vset.pattern.permute.xlu0 1
    %384 = vperm.xlu0 %383, %v353
    %v385 = vpop.permute.xlu0 %384
    %387 = vset.pattern.permute.xlu0 1
    %388 = vperm.xlu0 %387, %v355
    %v389 = vpop.permute.xlu0 %388
    %391 = vset.pattern.permute.xlu0 1
    %392 = vperm.xlu0 %391, %v357
    %v393 = vpop.permute.xlu0 %392
    %v395 = vmul.f32 %v385, %v380
    %v396 = vmul.f32 %v389, %v381
    %v397 = vmul.f32 %v393, %v382
    %v398 = vadd.f32 %v376, %v395
    %v399 = vadd.f32 %v377, %v396
    %v400 = vadd.f32 %v378, %v397
    %v401 = vld [vmem:[%s9] sm:$0x3]
    %v402 = vld [vmem:[%s3] sm:$0x3]
    %v403 = vld [vmem:[%s10] sm:$0xf]
    %vm404 = vcmask 31744
    %v406 = vsel %vm404, %v402, 0
    %vm408 = vcmask 1043456
    %v410 = vsel %vm408, %v403, 0
    %412 = vmatprep.subr.mxu0 0.0
    %413 = vmatpush1.msra.mxu0 %v410
    %414 = vmatprep.subr.mxu0 0.0
    %415 = vmatpush1.msra.mxu0 0.0
    %416 = vmatprep.subr.mxu0 0.0
    %417 = vmatpush1.msra.mxu0 0.0
    %418 = vmatprep.subr.mxu0 0.0
    %419 = vmatpush1.msra.mxu0 0.0
    %420 = vmatprep.subr.mxu0 0.0
    %421 = vmatpush1.msra.mxu0 0.0
    %422 = vmatprep.subr.mxu0 0.0
    %423 = vmatpush1.msra.mxu0 0.0
    %424 = vmatprep.subr.mxu0 0.0
    %425 = vmatpush1.msra.mxu0 0.0
    %426 = vmatprep.subr.mxu0 0.0
    %427 = vmatpush1.msra.mxu0 0.0
    %428 = vmatprep.subr.mxu0 0.0
    %429 = vmatpush1.msra.mxu0 0.0
    %430 = vmatprep.subr.mxu0 0.0
    %431 = vmatpush1.msra.mxu0 0.0
    %432 = vmatprep.subr.mxu0 0.0
    %433 = vmatpush1.msra.mxu0 0.0
    %434 = vmatprep.subr.mxu0 0.0
    %435 = vmatpush1.msra.mxu0 0.0
    %436 = vmatprep.subr.mxu0 0.0
    %437 = vmatpush1.msra.mxu0 0.0
    %438 = vmatprep.subr.mxu0 0.0
    %439 = vmatpush1.msra.mxu0 0.0
    %440 = vmatprep.subr.mxu0 0.0
    %441 = vmatpush1.msra.mxu0 0.0
    %442 = vmatprep.subr.mxu0 0.0
    %443 = vmatpush1.msra.mxu0 0.0
    %444 = vmatprep.subr.mxu0 0.0
    %445 = vmatpush1.msra.mxu0 0.0
    %446 = vmatprep.subr.mxu0 0.0
    %447 = vmatpush1.msra.mxu0 0.0
    %448 = vmatprep.subr.mxu0 0.0
    %449 = vmatpush1.msra.mxu0 0.0
    %450 = vmatprep.subr.mxu0 0.0
    %451 = vmatpush1.msra.mxu0 0.0
    %452 = vmatprep.subr.mxu0 0.0
    %453 = vmatpush1.msra.mxu0 0.0
    %454 = vmatprep.subr.mxu0 0.0
    %455 = vmatpush1.msra.mxu0 0.0
    %456 = vmatprep.subr.mxu0 0.0
    %457 = vmatpush1.msra.mxu0 0.0
    %458 = vmatprep.subr.mxu0 0.0
    %459 = vmatpush1.msra.mxu0 0.0
    %460 = vmatprep.subr.mxu0 0.0
    %461 = vmatpush1.msra.mxu0 0.0
    %462 = vmatprep.subr.mxu0 0.0
    %463 = vmatpush1.msra.mxu0 0.0
    %464 = vmatprep.subr.mxu0 0.0
    %465 = vmatpush1.msra.mxu0 0.0
    %466 = vmatprep.subr.mxu0 0.0
    %467 = vmatpush1.msra.mxu0 0.0
    %468 = vmatprep.subr.mxu0 0.0
    %469 = vmatpush1.msra.mxu0 0.0
    %470 = vmatprep.subr.mxu0 0.0
    %471 = vmatpush1.msra.mxu0 0.0
    %472 = vmatprep.subr.mxu0 0.0
    %473 = vmatpush1.msra.mxu0 0.0
    %474 = vmatprep.subr.mxu0 0.0
    %475 = vmatpush1.msra.mxu0 0.0
    %476 = vmatprep.mubr.f32.mxu0 0.0
    %477 = vmatmul.mubr.f32.gmra.mrb[0].mxu0 %v406
    %v478 = vpop.f32.mrb[0].mxu0
    %v479 = vadd.f32 0.0, %v478
    %v480 = vpop.f32.mrb[0].mxu0
    %481 = vdwg.mxu0
    %vm482 = vcmask 162816
    %v484 = vsel %vm482, %v401, 0
    %v487 = vsel %vm408, %v400, 0
    %489 = vmatprep.subr.mxu0 0.0
    %490 = vmatpush1.msra.mxu0 %v398
    %491 = vmatprep.subr.mxu0 0.0
    %492 = vmatpush1.msra.mxu0 %v399
    %493 = vmatprep.subr.mxu0 0.0
    %494 = vmatpush1.msra.mxu0 %v487
    %495 = vmatprep.subr.mxu0 0.0
    %496 = vmatpush1.msra.mxu0 0.0
    %497 = vmatprep.subr.mxu0 0.0
    %498 = vmatpush1.msra.mxu0 0.0
    %499 = vmatprep.subr.mxu0 0.0
    %500 = vmatpush1.msra.mxu0 0.0
    %501 = vmatprep.subr.mxu0 0.0
    %502 = vmatpush1.msra.mxu0 0.0
    %503 = vmatprep.subr.mxu0 0.0
    %504 = vmatpush1.msra.mxu0 0.0
    %505 = vmatprep.subr.mxu0 0.0
    %506 = vmatpush1.msra.mxu0 0.0
    %507 = vmatprep.subr.mxu0 0.0
    %508 = vmatpush1.msra.mxu0 0.0
    %509 = vmatprep.subr.mxu0 0.0
    %510 = vmatpush1.msra.mxu0 0.0
    %511 = vmatprep.subr.mxu0 0.0
    %512 = vmatpush1.msra.mxu0 0.0
    %513 = vmatprep.subr.mxu0 0.0
    %514 = vmatpush1.msra.mxu0 0.0
    %515 = vmatprep.subr.mxu0 0.0
    %516 = vmatpush1.msra.mxu0 0.0
    %517 = vmatprep.subr.mxu0 0.0
    %518 = vmatpush1.msra.mxu0 0.0
    %519 = vmatprep.subr.mxu0 0.0
    %520 = vmatpush1.msra.mxu0 0.0
    %521 = vmatprep.subr.mxu0 0.0
    %522 = vmatpush1.msra.mxu0 0.0
    %523 = vmatprep.subr.mxu0 0.0
    %524 = vmatpush1.msra.mxu0 0.0
    %525 = vmatprep.subr.mxu0 0.0
    %526 = vmatpush1.msra.mxu0 0.0
    %527 = vmatprep.subr.mxu0 0.0
    %528 = vmatpush1.msra.mxu0 0.0
    %529 = vmatprep.subr.mxu0 0.0
    %530 = vmatpush1.msra.mxu0 0.0
    %531 = vmatprep.subr.mxu0 0.0
    %532 = vmatpush1.msra.mxu0 0.0
    %533 = vmatprep.subr.mxu0 0.0
    %534 = vmatpush1.msra.mxu0 0.0
    %535 = vmatprep.subr.mxu0 0.0
    %536 = vmatpush1.msra.mxu0 0.0
    %537 = vmatprep.subr.mxu0 0.0
    %538 = vmatpush1.msra.mxu0 0.0
    %539 = vmatprep.subr.mxu0 0.0
    %540 = vmatpush1.msra.mxu0 0.0
    %541 = vmatprep.subr.mxu0 0.0
    %542 = vmatpush1.msra.mxu0 0.0
    %543 = vmatprep.subr.mxu0 0.0
    %544 = vmatpush1.msra.mxu0 0.0
    %545 = vmatprep.subr.mxu0 0.0
    %546 = vmatpush1.msra.mxu0 0.0
    %547 = vmatprep.subr.mxu0 0.0
    %548 = vmatpush1.msra.mxu0 0.0
    %549 = vmatprep.subr.mxu0 0.0
    %550 = vmatpush1.msra.mxu0 0.0
    %551 = vmatprep.subr.mxu0 0.0
    %552 = vmatpush1.msra.mxu0 0.0
    %553 = vmatprep.mubr.f32.mxu0 0.0
    %554 = vmatmul.mubr.f32.gmra.mrb[0].mxu0 %v484
    %v555 = vpop.f32.mrb[0].mxu0
    %v556 = vadd.f32 %v479, %v555
    %v557 = vpop.f32.mrb[0].mxu0
    %558 = vdwg.mxu0
    %v559 = vld [vmem:[%s11] sm:$0x1]
    %v560 = vstv %s68
    %v561 = vmul.f32 %v560, %v559
    %s562 = ssub.f32 1.0, %s68
    %v563 = vstv %s562
    %v564 = vmul.f32 %v563, %v556
    %v566 = vlaneseq
    %v567 = vshrl.u32 %v566, 7
    %v568 = vsub.s32 0, %v567
    %v569 = vrot.slane %v561, %v568
    %v571 = vadd.f32 %v569, %v564
    %v572 = vmul.f32 %v402, 1000000.0
    %v573 = vsub.f32 %v571, %v572
    %v574 = vld [vmem:[%s4] sm:$0x3]
    %v575 = vadd.f32 %v574, 1e-08
    %v576 = vlog2.pop %v575
    %v577 = vmul.f32 %v576, 0.6931472
    %v578 = vsub.f32 0.0, %v577
    %v579 = vadd.f32 %v578, 1e-08
    %v580 = vlog2.pop %v579
    %v581 = vmul.f32 %v580, 0.6931472
    %v582 = vsub.f32 0.0, %v581
    %v583 = vadd.f32 %v573, %v582
    %s584 = sld [smem:[#allocation3]]
    %v585 = vstv %s584
    %v586 = vmul.f32 %v583, %v585
    %vm587 = vcmask 25600
    %v588 = vsel %vm587, %v586, -inf
    %589 = vmax.xlane.f32.xlu0 %v588
    %v590 = vpop.xlane.xlu0 %589
    %v591 = vsub.f32 %v586, %v590
    %v592 = vmul.f32 %v591, 1.442695
    %v593 = vpow.pop %v592
    %v594 = vsel %vm587, %v593, 0.0
    %595 = vadd.xlane.f32.xlu0 %v594
    %v596 = vpop.xlane.xlu0 %595
    %v597 = vrcp.pop %v596
    %v598 = vmul.f32 %v593, %v597
    %v599 = vmul.f32 %v573, 10.0
    %v600 = vsel %vm587, %v599, -inf
    %601 = vmax.xlane.f32.xlu0 %v600
    %v602 = vpop.xlane.xlu0 %601
    %v603 = vsub.f32 %v599, %v602
    %v604 = vmul.f32 %v603, 1.442695
    %v605 = vpow.pop %v604
    %v606 = vsel %vm587, %v605, 0.0
    %607 = vadd.xlane.f32.xlu0 %v606
    %v608 = vpop.xlane.xlu0 %607
    %v609 = vrcp.pop %v608
    %v610 = vmul.f32 %v605, %v609
    %v611 = vmul.f32 %v583, 10.0
    %v612 = vsel %vm587, %v611, -inf
    %613 = vmax.xlane.f32.xlu0 %v612
    %v614 = vpop.xlane.xlu0 %613
    %v615 = vsub.f32 %v611, %v614
    %v616 = vmul.f32 %v615, 1.442695
    %v617 = vpow.pop %v616
    %v618 = vsel %vm587, %v617, 0.0
    %619 = vadd.xlane.f32.xlu0 %v618
    %v620 = vpop.xlane.xlu0 %619
    %v621 = vrcp.pop %v620
    %v622 = vmul.f32 %v617, %v621
    %v623 = vmul.f32 %v560, %v622
    %v624 = vmul.f32 %v563, %v610
    %v625 = vadd.f32 %v623, %v624
    %626 = vst.msk [vmem:[#allocation4] sm:$0x3] %vm587, %v598
    %627 = vst.msk [vmem:[#allocation6] sm:$0x3] %vm587, %v625
    // Predicated region
    $region50: #{policy_selector_forward.1} parent=1 // pred_check
      _
    $region51: #{policy_selector_forward.1} parent=1 // pred_check_branch
      %629 = sbr.rel (0) target = $region53
    $region52: #{policy_selector_forward.1} parent=1 // pred_region
      %s631 = ssub.s32 32, 32
      %632 = vsyncadd [#allocation5], %s631
      %s634 = sshll.u32 [#allocation4], 4
      %s635 = int_to_ptr.vmem [resolvable:$true] %s634
      %637 = dma.vmem_to_hbm [thread:$0]  %s635, 32, %s12, [#allocation5]
    $region53: #{policy_selector_forward.1} parent=1 // pred_fallthru
      _
    // Predicated region
    $region54: #{policy_selector_forward.1} parent=1 // pred_check
      _
    $region55: #{policy_selector_forward.1} parent=1 // pred_check_branch
      %639 = sbr.rel (0) target = $region57
    $region56: #{policy_selector_forward.1} parent=1 // pred_region
      %s641 = ssub.s32 32, 32
      %642 = vsyncadd [#allocation7], %s641
      %s644 = sshll.u32 [#allocation6], 4
      %s645 = int_to_ptr.vmem [resolvable:$true] %s644
      %647 = dma.vmem_to_hbm [thread:$0]  %s645, 32, %s13, [#allocation7]
    $region57: #{policy_selector_forward.1} parent=1 // pred_fallthru
      _
    // Predicated region
    $region58: #{policy_selector_forward.1} parent=1 // pred_check
      _
    $region59: #{policy_selector_forward.1} parent=1 // pred_check_branch
      %649 = sbr.rel (0) target = $region61
    $region60: #{policy_selector_forward.1} parent=1 // pred_region
      %650 = dma.done [#allocation5], 32
    $region61: #{policy_selector_forward.1} parent=1 // pred_fallthru
      _
    // Predicated region
    $region62: #{policy_selector_forward.1} parent=1 // pred_check
      _
    $region63: #{policy_selector_forward.1} parent=1 // pred_check_branch
      %652 = sbr.rel (0) target = $region65
    $region64: #{policy_selector_forward.1} parent=1 // pred_region
      %653 = dma.done [#allocation7], 32
    $region65: #{policy_selector_forward.1} parent=1 // pred_fallthru
      _
    %654 = vsyncpa [#allocation5], 1
    %655 = vsyncpa [#allocation7], 1

</llo_original>
